<compile_context>
chip_gen: v5e
topology: v5e:2x2
jax: 0.10.0
libtpu: 0.0.40
codegen_flags: <defaults>
</compile_context>

<pallas_src>
import functools

import jax
import jax.numpy as jnp
from jax.experimental import pallas as pl
from jax.experimental.pallas import tpu as pltpu
import numpy as np


# ----------------------------------------------------------------------------- helpers
def _round_up(x, m):
    return ((x + m - 1) // m) * m


def _largest_aligned_divisor(total, cap, align=128):
    """Largest multiple of `align` that divides `total` and is <= cap (>= align)."""
    cap = max(align, (cap // align) * align)
    t = min(cap, total)
    t = (t // align) * align
    while t > align:
        if total % t == 0:
            return t
        t -= align
    return align


# ----------------------------------------------------------------------------- kernels
def _linear_kernel_bias(x_ref, w_ref, b_ref, o_ref, acc_ref):
    # x_ref: (tm, tk)  activation tile
    # w_ref: (tk, tn)  weight tile, pre-transposed [K, N] layout
    # b_ref: (1, tn)   bias row tile
    # o_ref: (tm, tn)  output tile
    # acc_ref: (tm, tn) f32 accumulator (VMEM scratch, persists across k)
    @pl.when(pl.program_id(2) == 0)
    def _():
        # Fold the bias into the accumulator init (one fewer VPU pass at finalize).
        acc_ref[...] = jnp.broadcast_to(
            b_ref[...].astype(jnp.float32), acc_ref.shape)

    acc_ref[...] += jnp.dot(x_ref[...], w_ref[...],
                            preferred_element_type=jnp.float32)

    @pl.when(pl.program_id(2) == pl.num_programs(2) - 1)
    def _():
        o_ref[...] = acc_ref[...].astype(o_ref.dtype)


def _linear_kernel_nobias(x_ref, w_ref, o_ref, acc_ref):
    @pl.when(pl.program_id(2) == 0)
    def _():
        acc_ref[...] = jnp.zeros_like(acc_ref)

    acc_ref[...] += jnp.dot(x_ref[...], w_ref[...],
                            preferred_element_type=jnp.float32)

    @pl.when(pl.program_id(2) == pl.num_programs(2) - 1)
    def _():
        o_ref[...] = acc_ref[...].astype(o_ref.dtype)


# ----------------------------------------------------------------------------- one-time weight prep (hoisted out of forward)
def prepare_linear_params(weight, bias=None, *, compute_dtype=jnp.float32,
                          tn=512, tk=512):
    """Cast, transpose to [K, N] and zero-pad the static parameters ONCE.

    weight: [out_features, in_features] (native PyTorch layout)
    bias:   [out_features] or None
    Returns (w_kn, b_row, static_kwargs) where static_kwargs feed
    pallas_linear_prepped's static arguments.
    """
    out_features, in_features = weight.shape
    tn_eff = min(tn, _round_up(out_features, 128))
    tk_eff = min(tk, _round_up(in_features, 128))
    n_pad = _round_up(out_features, tn_eff)
    k_pad = _round_up(in_features, tk_eff)

    w_kn = jnp.asarray(weight, dtype=compute_dtype).T        # [K, N]
    if (k_pad, n_pad) != (in_features, out_features):
        w_kn = jnp.pad(w_kn, ((0, k_pad - in_features), (0, n_pad - out_features)))

    b_row = None
    if bias is not None:
        b_row = jnp.asarray(bias, dtype=compute_dtype).reshape(1, out_features)
        if n_pad != out_features:
            b_row = jnp.pad(b_row, ((0, 0), (0, n_pad - out_features)))

    static_kwargs = dict(out_features=out_features, tn=tn_eff, tk=tk_eff)
    return w_kn, b_row, static_kwargs


# ----------------------------------------------------------------------------- forward
@functools.partial(jax.jit, static_argnames=("out_features", "tn", "tk", "tm"))
def pallas_linear_prepped(x, w_kn, b_row=None, *, out_features, tn, tk, tm=512):
    """y = x @ weight.T + bias with pre-prepared (padded, [K,N]) weights."""
    k_pad, n_pad = w_kn.shape
    orig_shape = x.shape
    in_features = orig_shape[-1]
    out_dtype = x.dtype
    compute_dtype = w_kn.dtype

    x2d = x.reshape(-1, in_features).astype(compute_dtype)   # (M, K)
    m = x2d.shape[0]

    # Adaptive tm: avoid >~25% M-padding waste on ragged M.
    tm_eff = _round_up(min(tm, _round_up(m, 8)), 8)
    while tm_eff > 128 and _round_up(m, tm_eff) > 1.25 * m:
        tm_eff = _round_up(max(128, tm_eff // 2), 8)
    m_pad = _round_up(m, tm_eff)

    # Megacore: when M has a single block, ensure >=2 blocks along N if possible
    # so both TensorCores (v7x) stay busy.
    tn_eff = tn
    if m_pad // tm_eff < 2 and n_pad // tn_eff < 2 and n_pad >= 256:
        tn_eff = _largest_aligned_divisor(n_pad, n_pad // 2)

    # Zero-pad activations only (weights were padded once at prep time).
    if (m_pad, k_pad) != (m, in_features):
        x2d = jnp.pad(x2d, ((0, m_pad - m), (0, k_pad - in_features)))

    grid = (m_pad // tm_eff, n_pad // tn_eff, k_pad // tk)

    itemsize = jnp.dtype(compute_dtype).itemsize
    out_itemsize = jnp.dtype(out_dtype).itemsize
    cost = pl.CostEstimate(
        flops=2 * m_pad * k_pad * n_pad,
        transcendentals=0,
        bytes_accessed=int(
            m_pad * k_pad * (n_pad // tn_eff) * itemsize        # x re-streamed per j
            + k_pad * n_pad * (m_pad // tm_eff) * itemsize      # w re-streamed per i
            + m_pad * n_pad * out_itemsize),                    # output written once
    )

    # VMEM budget: double-buffered tiles + f32 accumulator, capped at 48 MiB so
    # big-tile configs never overrun v7x's 64 MiB physical VMEM.
    vmem_bytes = (2 * (tm_eff * tk + tk * tn_eff) * itemsize
                  + 2 * tm_eff * tn_eff * out_itemsize
                  + 2 * tn_eff * itemsize
                  + tm_eff * tn_eff * 4)
    vmem_limit = int(min(48 << 20, max(int(vmem_bytes * 1.25) + (2 << 20), 32 << 20)))

    compiler_params = pltpu.CompilerParams(
        dimension_semantics=("parallel", "parallel", "arbitrary"),
        vmem_limit_bytes=vmem_limit,
    )

    x_spec = pl.BlockSpec((tm_eff, tk), lambda i, j, k: (i, k))
    w_spec = pl.BlockSpec((tk, tn_eff), lambda i, j, k: (k, j))
    o_spec = pl.BlockSpec((tm_eff, tn_eff), lambda i, j, k: (i, j))
    scratch = [pltpu.VMEM((tm_eff, tn_eff), jnp.float32)]

    if b_row is not None:
        b_spec = pl.BlockSpec((1, tn_eff), lambda i, j, k: (0, j))
        out = pl.pallas_call(
            _linear_kernel_bias,
            out_shape=jax.ShapeDtypeStruct((m_pad, n_pad), out_dtype),
            grid_spec=pltpu.PrefetchScalarGridSpec(
                num_scalar_prefetch=0,
                grid=grid,
                in_specs=[x_spec, w_spec, b_spec],
                out_specs=o_spec,
                scratch_shapes=scratch,
            ),
            compiler_params=compiler_params,
            cost_estimate=cost,
        )(x2d, w_kn, b_row)
    else:
        out = pl.pallas_call(
            _linear_kernel_nobias,
            out_shape=jax.ShapeDtypeStruct((m_pad, n_pad), out_dtype),
            grid_spec=pltpu.PrefetchScalarGridSpec(
                num_scalar_prefetch=0,
                grid=grid,
                in_specs=[x_spec, w_spec],
                out_specs=o_spec,
                scratch_shapes=scratch,
            ),
            compiler_params=compiler_params,
            cost_estimate=cost,
        )(x2d, w_kn)

    out = out[:m, :out_features]
    return out.reshape(*orig_shape[:-1], out_features)


def pallas_linear(x, weight, bias=None, *, tm=512, tn=512, tk=512):
    """Convenience one-shot path (preps weights per call, mirroring torch's
    `weight.to(x.dtype)`). For repeated calls with the same parameters, hoist
    prepare_linear_params() outside and call pallas_linear_prepped() directly."""
    w_kn, b_row, static_kwargs = prepare_linear_params(
        weight, bias, compute_dtype=x.dtype, tn=tn, tk=tk)
    return pallas_linear_prepped(x, w_kn, b_row, tm=tm, **static_kwargs)


# ----------------------------------------------------------------------------- init (mirrors PyTorch weight_init)
def init_linear_params(key, in_features, out_features, bias=True,
                       init_mode="kaiming_normal", init_weight=1.0, init_bias=0.0,
                       dtype=jnp.float32):
    kw, kb = jax.random.split(key)
    fan_in, fan_out = in_features, out_features

    def _init(k, shape):
        if init_mode == "xavier_uniform":
            return np.sqrt(6.0 / (fan_in + fan_out)) * jax.random.uniform(
                k, shape, dtype, minval=-1.0, maxval=1.0)
        if init_mode == "xavier_normal":
            return np.sqrt(2.0 / (fan_in + fan_out)) * jax.random.normal(k, shape, dtype)
        if init_mode == "kaiming_uniform":
            return np.sqrt(3.0 / fan_in) * jax.random.uniform(
                k, shape, dtype, minval=-1.0, maxval=1.0)
        if init_mode == "kaiming_normal":
            return np.sqrt(1.0 / fan_in) * jax.random.normal(k, shape, dtype)
        raise ValueError(f'Invalid init mode "{init_mode}"')

    weight = _init(kw, (out_features, in_features)) * init_weight
    b = (_init(kb, (out_features,)) * init_bias) if bias else None
    return weight, b


# ----------------------------------------------------------------------------- demo / correctness check
if __name__ == "__main__":
    key = jax.random.PRNGKey(0)
    k_x, k_p = jax.random.split(key)

    batch, seq, in_features, out_features = 2, 8, 32, 64
    x = jax.random.normal(k_x, (batch, seq, in_features), dtype=jnp.float32)

    # Nonzero init_bias so the bias-add path is actually exercised.
    weight, bias = init_linear_params(k_p, in_features, out_features,
                                      bias=True, init_mode="kaiming_normal",
                                      init_weight=1.0, init_bias=0.5)

    # Recommended path: one-time weight prep, then jitted forward.
    w_kn, b_row, static_kwargs = prepare_linear_params(
        weight, bias, compute_dtype=x.dtype)
    y = pallas_linear_prepped(x, w_kn, b_row, **static_kwargs)
    y = jax.block_until_ready(y)

    # Reference check in plain JAX.
    y_ref = x @ weight.T + bias
    assert y.shape == (batch, seq, out_features)
    np.testing.assert_allclose(np.asarray(y), np.asarray(y_ref), rtol=1e-5, atol=1e-5)

    # Also exercise the no-bias path and the convenience wrapper once.
    y_nb = jax.block_until_ready(pallas_linear(x, weight, None))
    np.testing.assert_allclose(np.asarray(y_nb), np.asarray(x @ weight.T),
                               rtol=1e-5, atol=1e-5)

    print("KERNEL_OK")
</pallas_src>

<mosaic_0001>
module attributes {stable_mosaic.version = 11 : i64} {
  func.func @_linear_kernel_bias(%arg0: i32, %arg1: i32, %arg2: i32, %arg3: memref<16x128xf32, #tpu.memory_space<vmem>>, %arg4: memref<128x128xf32, #tpu.memory_space<vmem>>, %arg5: memref<1x128xf32, #tpu.memory_space<vmem>>, %arg6: memref<16x128xf32, #tpu.memory_space<vmem>>, %arg7: memref<16x128xf32, #tpu.memory_space<vmem>>) attributes {dimension_semantics = [#tpu.dimension_semantics<parallel>, #tpu.dimension_semantics<parallel>, #tpu.dimension_semantics<arbitrary>], iteration_bounds = array<i64: 1, 1, 1>, scalar_prefetch = 0 : i64, scratch_operands = 1 : i64, tpu.core_type = #tpu.core_type<tc>, window_params = [{transform_indices = @transform_0, window_bounds = array<i64: 16, 128>}, {transform_indices = @transform_1, window_bounds = array<i64: 128, 128>}, {transform_indices = @transform_2, window_bounds = array<i64: 1, 128>}, {transform_indices = @transform_3, window_bounds = array<i64: 16, 128>}]} {
    %c0_i32 = arith.constant 0 : i32
    %0 = arith.cmpi eq, %arg2, %c0_i32 : i32
    %1 = arith.extui %0 : i1 to i32
    %c0_i32_0 = arith.constant 0 : i32
    %2 = arith.cmpi ne, %1, %c0_i32_0 : i32
    scf.if %2 {
      %c0_10 = arith.constant 0 : index
      %c0_11 = arith.constant 0 : index
      %12 = vector.load %arg5[%c0_10, %c0_11] : memref<1x128xf32, #tpu.memory_space<vmem>>, vector<1x128xf32>
      %13 = vector.shape_cast %12 : vector<1x128xf32> to vector<1x128xf32>
      %14 = vector.broadcast %13 : vector<1x128xf32> to vector<16x128xf32>
      %c0_12 = arith.constant 0 : index
      %c0_13 = arith.constant 0 : index
      %15 = vector.load %arg7[%c0_12, %c0_13] : memref<16x128xf32, #tpu.memory_space<vmem>>, vector<16x128xf32>
      tpu.vector_store %arg7[%c0_12, %c0_13], %14 {strides = array<i32>} : memref<16x128xf32, #tpu.memory_space<vmem>>, vector<16x128xf32>,
    } else {
    }
    %c0 = arith.constant 0 : index
    %c0_1 = arith.constant 0 : index
    %3 = vector.load %arg7[%c0, %c0_1] : memref<16x128xf32, #tpu.memory_space<vmem>>, vector<16x128xf32>
    %c0_2 = arith.constant 0 : index
    %c0_3 = arith.constant 0 : index
    %4 = vector.load %arg3[%c0_2, %c0_3] : memref<16x128xf32, #tpu.memory_space<vmem>>, vector<16x128xf32>
    %c0_4 = arith.constant 0 : index
    %c0_5 = arith.constant 0 : index
    %5 = vector.load %arg4[%c0_4, %c0_5] : memref<128x128xf32, #tpu.memory_space<vmem>>, vector<128x128xf32>
    %cst = arith.constant dense<0.000000e+00> : vector<16x128xf32>
    %6 = tpu.matmul %4, %5, %cst {dimension_numbers = #tpu.dot_dimension_numbers<[1], [0], [0], [1], [0, 0, 1, 1], [], []>} : vector<16x128xf32>, vector<128x128xf32>, vector<16x128xf32> -> vector<16x128xf32>
    %7 = arith.addf %3, %6 : vector<16x128xf32>
    %c0_6 = arith.constant 0 : index
    %c0_7 = arith.constant 0 : index
    %8 = vector.load %arg7[%c0_6, %c0_7] : memref<16x128xf32, #tpu.memory_space<vmem>>, vector<16x128xf32>
    tpu.vector_store %arg7[%c0_6, %c0_7], %7 {strides = array<i32>} : memref<16x128xf32, #tpu.memory_space<vmem>>, vector<16x128xf32>,
    %c0_i32_8 = arith.constant 0 : i32
    %9 = arith.cmpi eq, %arg2, %c0_i32_8 : i32
    %10 = arith.extui %9 : i1 to i32
    %c0_i32_9 = arith.constant 0 : i32
    %11 = arith.cmpi ne, %10, %c0_i32_9 : i32
    scf.if %11 {
      %c0_10 = arith.constant 0 : index
      %c0_11 = arith.constant 0 : index
      %12 = vector.load %arg7[%c0_10, %c0_11] : memref<16x128xf32, #tpu.memory_space<vmem>>, vector<16x128xf32>
      %c0_12 = arith.constant 0 : index
      %c0_13 = arith.constant 0 : index
      %13 = vector.load %arg6[%c0_12, %c0_13] : memref<16x128xf32, #tpu.memory_space<vmem>>, vector<16x128xf32>
      tpu.vector_store %arg6[%c0_12, %c0_13], %12 {strides = array<i32>} : memref<16x128xf32, #tpu.memory_space<vmem>>, vector<16x128xf32>,
    } else {
    }
    return
  }
  func.func @transform_0(%arg0: i32, %arg1: i32, %arg2: i32) -> (i32, i32) {
    %c0_i32 = arith.constant 0 : i32
    return %arg0, %arg2 : i32, i32
  }
  func.func @transform_1(%arg0: i32, %arg1: i32, %arg2: i32) -> (i32, i32) {
    %c0_i32 = arith.constant 0 : i32
    return %arg2, %arg1 : i32, i32
  }
  func.func @transform_2(%arg0: i32, %arg1: i32, %arg2: i32) -> (i32, i32) {
    %c0_i32 = arith.constant 0 : i32
    %c0_i32_0 = arith.constant 0 : i32
    return %c0_i32, %arg1 : i32, i32
  }
  func.func @transform_3(%arg0: i32, %arg1: i32, %arg2: i32) -> (i32, i32) {
    %c0_i32 = arith.constant 0 : i32
    return %arg0, %arg1 : i32, i32
  }
}

</mosaic_0001>

<llo_original>
// kernel: pallas_linear_prepped.1
$region0: #{pallas_linear_prepped.1}
  #allocation0 [shape = 'u32[]', space=smem, size = 0x4, offset = 0x4, fixed_abs, tag = 'smem constant byte address 0x4 - core index']
  #allocation1 [shape = 'u32[72,128]{1,0:T(1,128)}', space=vmem, size = 0x9000, scoped, tag = 'internal scratch']
  #allocation2 [shape = 'f32[16,128]{1,0:T(8,128)}', space=vmem, size = 0x2000, scoped, tag = 'scratch operand']
  %s0 = inlined_call_operand.vmem [shape: f32[16,128], index: 0, kind: input, shape index: {}]
  %s1 = inlined_call_operand.hbm [shape: f32[128,128], index: 1, kind: input, shape index: {}]
  %s2 = inlined_call_operand.vmem [shape: f32[1,128], index: 2, kind: input, shape index: {}]
  %s3 = inlined_call_operand.vmem [shape: f32[16,128], index: 3, kind: output, shape index: {}]
  %s4 = sld [smem:[#allocation0]]
  $region34: #{pallas_linear_prepped.1} parent=0
    _
  %s6 = ssub.s32 1, %s4
  %s7 = scalar_select 0, %s6, %s4
  $region1: #{pallas_linear_prepped.1} parent=0
    #allocation3 [shape = 'u8[65536]{0}', space=vmem, size = 0x10000, scoped, tag = 'input window, operand 1, single buffered']
    #allocation4 [shape = 's32[1]{0}', space=sflag, size = 0x4, scoped, tag = 'scoped memory for pallas_linear_prepped.1']
    %8 = vsyncpa [#allocation4], 0
    // Predicated region
    $region2: #{pallas_linear_prepped.1} parent=1 // pred_check
      _
    $region3: #{pallas_linear_prepped.1} parent=1 // pred_check_branch
      %10 = sbr.rel (0) target = $region5
    $region4: #{pallas_linear_prepped.1} parent=1 // pred_region
      _
    $region5: #{pallas_linear_prepped.1} parent=1 // pred_fallthru
      _
    // Predicated region
    $region6: #{pallas_linear_prepped.1} parent=1 // pred_check
      _
    $region7: #{pallas_linear_prepped.1} parent=1 // pred_check_branch
      %12 = sbr.rel (0) target = $region9
    $region8: #{pallas_linear_prepped.1} parent=1 // pred_region
      %14 = vsyncadd [#allocation4], 0
      %s15 = sshll.u32 %s1, 4
      %s16 = int_to_ptr.hbm [resolvable:$true] %s15
      %s17 = sshll.u32 [#allocation3], 4
      %s18 = int_to_ptr.vmem [resolvable:$true] %s17
      %23 = dma.hbm_to_vmem [thread:$0]  %s16, 2048, %s18, [#allocation4], 128, 128, 8
    $region9: #{pallas_linear_prepped.1} parent=1 // pred_fallthru
      _
    // Predicated region
    $region10: #{pallas_linear_prepped.1} parent=1 // pred_check
      _
    $region11: #{pallas_linear_prepped.1} parent=1 // pred_check_branch
      %25 = sbr.rel (0) target = $region13
    $region12: #{pallas_linear_prepped.1} parent=1 // pred_region
      _
    $region13: #{pallas_linear_prepped.1} parent=1 // pred_fallthru
      _
    // Predicated region
    $region14: #{pallas_linear_prepped.1} parent=1 // pred_check
      _
    $region15: #{pallas_linear_prepped.1} parent=1 // pred_check_branch
      %27 = sbr.rel (0) target = $region17
    $region16: #{pallas_linear_prepped.1} parent=1 // pred_region
      %29 = dma.done [#allocation4], 2048
    $region17: #{pallas_linear_prepped.1} parent=1 // pred_fallthru
      _
    %p30 = scmp.eq.s32.totalorder 0, 0
    // Predicated region
    $region18: #{pallas_linear_prepped.1} parent=1 // pred_check
      %p31 = pneg %p30
    $region19: #{pallas_linear_prepped.1} parent=1 // pred_check_branch
      %33 = sbr.rel (%p31) target = $region21
    $region20: #{pallas_linear_prepped.1} parent=1 // pred_region
      %v34 = vld [vmem:[%s2] sm:$0x1]
      %v36 = vperm.slane %v34, 0
      %38 = vst [vmem:[#allocation2] sm:$0xff] %v36
      %39 = vst [vmem:[#allocation2 + $0x8] sm:$0xff] %v36
    $region21: #{pallas_linear_prepped.1} parent=1 // pred_fallthru
      _
    %v40 = vld [vmem:[#allocation2] sm:$0xff]
    %v41 = vld [vmem:[#allocation2 + $0x8] sm:$0xff]
    %v42 = vld [vmem:[%s0] sm:$0xff]
    %v43 = vld [vmem:[%s0 + $0x8] sm:$0xff]
    %v44 = vld [vmem:[#allocation3] sm:$0xff]
    %v45 = vld [vmem:[#allocation3 + $0x8] sm:$0xff]
    %v46 = vld [vmem:[#allocation3 + $0x10] sm:$0xff]
    %v47 = vld [vmem:[#allocation3 + $0x18] sm:$0xff]
    %v48 = vld [vmem:[#allocation3 + $0x20] sm:$0xff]
    %v49 = vld [vmem:[#allocation3 + $0x28] sm:$0xff]
    %v50 = vld [vmem:[#allocation3 + $0x30] sm:$0xff]
    %v51 = vld [vmem:[#allocation3 + $0x38] sm:$0xff]
    %v52 = vld [vmem:[#allocation3 + $0x40] sm:$0xff]
    %v53 = vld [vmem:[#allocation3 + $0x48] sm:$0xff]
    %v54 = vld [vmem:[#allocation3 + $0x50] sm:$0xff]
    %v55 = vld [vmem:[#allocation3 + $0x58] sm:$0xff]
    %v56 = vld [vmem:[#allocation3 + $0x60] sm:$0xff]
    %v57 = vld [vmem:[#allocation3 + $0x68] sm:$0xff]
    %v58 = vld [vmem:[#allocation3 + $0x70] sm:$0xff]
    %v59 = vld [vmem:[#allocation3 + $0x78] sm:$0xff]
    %60 = vmatpush.msra.mxu0 %v59
    %61 = vmatpush.msra.mxu0 %v58
    %62 = vmatpush.msra.mxu0 %v57
    %63 = vmatpush.msra.mxu0 %v56
    %64 = vmatpush.msra.mxu0 %v55
    %65 = vmatpush.msra.mxu0 %v54
    %66 = vmatpush.msra.mxu0 %v53
    %67 = vmatpush.msra.mxu0 %v52
    %68 = vmatpush.msra.mxu0 %v51
    %69 = vmatpush.msra.mxu0 %v50
    %70 = vmatpush.msra.mxu0 %v49
    %71 = vmatpush.msra.mxu0 %v48
    %72 = vmatpush.msra.mxu0 %v47
    %73 = vmatpush.msra.mxu0 %v46
    %74 = vmatpush.msra.mxu0 %v45
    %75 = vmatpush.msra.mxu0 %v44
    %76 = vmatmul.f32.gmra.mxu0 %v42
    %v77 = vpop.f32.mrf.mxu0
    %v78 = vadd.f32 0.0, %v77
    %79 = vmatmul.f32.gmra.mxu0 %v43
    %v80 = vpop.f32.mrf.mxu0
    %v81 = vadd.f32 0.0, %v80
    %82 = vdwg.mxu0
    %v83 = vadd.f32 %v40, %v78
    %v84 = vadd.f32 %v41, %v81
    %85 = vst [vmem:[#allocation2] sm:$0xff] %v83
    %86 = vst [vmem:[#allocation2 + $0x8] sm:$0xff] %v84
    // Predicated region
    $region22: #{pallas_linear_prepped.1} parent=1 // pred_check
      %p87 = pneg %p30
    $region23: #{pallas_linear_prepped.1} parent=1 // pred_check_branch
      %89 = sbr.rel (%p87) target = $region25
    $region24: #{pallas_linear_prepped.1} parent=1 // pred_region
      %v90 = vld [vmem:[#allocation2] sm:$0xff]
      %v91 = vld [vmem:[#allocation2 + $0x8] sm:$0xff]
      %92 = vst [vmem:[%s3] sm:$0xff] %v90
      %93 = vst [vmem:[%s3 + $0x8] sm:$0xff] %v91
    $region25: #{pallas_linear_prepped.1} parent=1 // pred_fallthru
      _
    // Predicated region
    $region26: #{pallas_linear_prepped.1} parent=1 // pred_check
      _
    $region27: #{pallas_linear_prepped.1} parent=1 // pred_check_branch
      %95 = sbr.rel (0) target = $region29
    $region28: #{pallas_linear_prepped.1} parent=1 // pred_region
      _
    $region29: #{pallas_linear_prepped.1} parent=1 // pred_fallthru
      _
    // Predicated region
    $region30: #{pallas_linear_prepped.1} parent=1 // pred_check
      _
    $region31: #{pallas_linear_prepped.1} parent=1 // pred_check_branch
      %97 = sbr.rel (0) target = $region33
    $region32: #{pallas_linear_prepped.1} parent=1 // pred_region
      _
    $region33: #{pallas_linear_prepped.1} parent=1 // pred_fallthru
      _
    %98 = vsyncpa [#allocation4], 1

</llo_original>
